<compile_context>
chip_gen: v7x
topology: tpu7x:2x2x1
jax: 0.10.0
libtpu: 0.0.40
codegen_flags: <defaults>
</compile_context>

<pallas_src>
import functools

import jax
import jax.numpy as jnp
from jax.experimental import pallas as pl
from jax.experimental.pallas import tpu as pltpu


def _topk_route_kernel(x_ref, sel_ref, w_ref, b_ref, vals_ref, idx_ref,
                       acc_ref, *, k, seq_len):
    # x_ref:   (tb, ts, nx)   current (batch-tile, seq-tile) block of x
    # sel_ref: (tb, tb*ts)    block-diagonal ones (resident; MXU reduction)
    # w_ref:   (nx, n_exp)    router weight (stored transposed vs. torch)
    # b_ref:   (1, n_exp)     router bias
    # vals_ref/idx_ref: (tb, k) outputs
    # acc_ref: (tb, nx) f32 VMEM scratch, resident across the seq axis
    si = pl.program_id(1)
    num_s = pl.num_programs(1)

    @pl.when(si == 0)
    def _init():
        acc_ref[...] = jnp.zeros_like(acc_ref)

    tb, ts, nx = x_ref.shape
    # Streaming reduction over this sequence tile, done on the MXU:
    # sel @ x2d == sum_s x[b, s, :] per batch row; nx stays on the lane dim.
    # Leading-dim collapse is a free relabeling since ts % 8 == 0.
    x2d = x_ref[...].reshape(tb * ts, nx)
    acc_ref[...] += jnp.dot(sel_ref[...], x2d,
                            preferred_element_type=jnp.float32)

    @pl.when(si == num_s - 1)
    def _epilogue():
        n_exp = w_ref.shape[1]
        # mean over S hoisted before the linear layer (exact by linearity):
        #   mean_S(x @ W + b) == mean_S(x) @ W + b
        x_mean = acc_ref[...] * jnp.float32(1.0 / seq_len)            # (tb, nx)
        w = w_ref[...].astype(jnp.float32)
        bias = b_ref[...].astype(jnp.float32)
        scores = jnp.dot(x_mean, w, preferred_element_type=jnp.float32) + bias

        # Stable softmax numerator; top-k ordering on the unnormalized `e`
        # is identical, so only the k winners get the exact divide.
        m = jnp.max(scores, axis=-1, keepdims=True)
        e = jnp.exp(scores - m)
        denom = jnp.sum(e, axis=-1, keepdims=True)

        iota = jax.lax.broadcasted_iota(jnp.int32, (tb, n_exp), 1)
        neg_inf = jnp.float32(-jnp.inf)
        big_idx = jnp.int32(n_exp)

        work = e
        val_cols, idx_cols = [], []
        for _ in range(k):                        # k is small and static
            cur_max = jnp.max(work, axis=-1, keepdims=True)           # (tb, 1)
            cur_idx = jnp.min(jnp.where(work == cur_max, iota, big_idx),
                              axis=-1, keepdims=True)                 # first hit
            val_cols.append(cur_max)
            idx_cols.append(cur_idx)
            work = jnp.where(iota == cur_idx, neg_inf, work)

        vals_ref[...] = jnp.concatenate(val_cols, axis=-1) / denom    # (tb, k)
        idx_ref[...] = jnp.concatenate(idx_cols, axis=-1)             # (tb, k)


def _round_up(n, m):
    return ((n + m - 1) // m) * m


def _vmem_capacity_bytes():
    try:
        cap = int(getattr(pltpu.get_tpu_info(), "vmem_capacity_bytes", 0))
        if cap > 0:
            return cap
    except Exception:
        pass
    return 64 * 1024 * 1024      # conservative: v7x per-TensorCore VMEM


def _pick_batch_tile(B):
    """Batch tile: multiple of 8 (or full B). For B > 8 keep >= 2 blocks so the
    'parallel' batch axis can shard across v7x's two TensorCores."""
    if B <= 8:
        return B, B
    B_pad = _round_up(B, 8)
    cap = min(32, max(8, B_pad // 2))
    tb, d = 8, 8
    while d <= cap:
        if B_pad % d == 0:
            tb = d
        d += 8
    return tb, B_pad


def _pick_seq_tile(S, tb, nx, itemsize, k, w_bytes, b_bytes, vmem_cap):
    """Seq tile from an explicit VMEM budget with ~25% headroom:
    2x x tile + 2x sel + resident f32 acc + 2x (W, b) + output blocks."""
    budget = (vmem_cap * 3) // 4
    out_bytes = 2 * 2 * (tb * max(k, 1) * 4)
    fixed = tb * nx * 4 + 2 * (w_bytes + b_bytes) + out_bytes
    per_row = 2 * tb * nx * itemsize + 2 * tb * tb * itemsize
    avail_rows = max(8, (budget - fixed) // max(1, per_row))
    # Past ~16 MiB per x buffer the pipeline already sits on the HBM roofline;
    # bigger tiles only burn VMEM (matters most on v7x's 64 MiB).
    cap_rows = max(8, (16 * 1024 * 1024) // max(1, tb * nx * itemsize))
    max_rows = max(8, (min(avail_rows, cap_rows) // 8) * 8)
    S8 = _round_up(S, 8)
    if S8 <= max_rows:
        return S8, S8
    return max_rows, _round_up(S, max_rows)


def topk_route(x, w, b, k, *, seq_tile=None, batch_tile=None):
    """TopKRoute.forward. x: (B,S,nx), w: (nx,n_exp) [= torch weight.T],
    b: (n_exp,) or (1,n_exp). Any of them may be f32 or bf16.
    Returns (vals (B,k) f32, idx (B,k) i32)."""
    B, S, nx = x.shape
    n_exp = w.shape[1]
    assert w.shape == (nx, n_exp)
    assert 0 < k <= n_exp
    b2 = jnp.reshape(b, (1, n_exp))

    itemsize = x.dtype.itemsize
    w_bytes = w.size * w.dtype.itemsize
    b_bytes = b2.size * b2.dtype.itemsize
    vmem_cap = _vmem_capacity_bytes()

    # ---- batch tile ----
    if batch_tile is not None:
        tb = int(batch_tile)
        assert B % tb == 0 and (tb % 8 == 0 or tb == B)
        B_pad = B
    else:
        tb, B_pad = _pick_batch_tile(B)

    # ---- sequence tile (zero-padding decouples tiling from divisibility;
    #      padded rows are zero and the mean divides by the true S) ----
    if seq_tile is not None:
        ts = int(seq_tile)
        assert S % ts == 0 and ts % 8 == 0, "seq_tile must be a multiple of 8 dividing S"
        S_pad = S
    else:
        ts, S_pad = _pick_seq_tile(S, tb, nx, itemsize, k, w_bytes, b_bytes, vmem_cap)

    if (B_pad, S_pad) != (B, S):
        x = jnp.pad(x, ((0, B_pad - B), (0, S_pad - S), (0, 0)))

    grid = (B_pad // tb, S_pad // ts)

    # Block-diagonal ones used to run the S-reduction on the MXU; constant
    # index_map -> DMAed once, stays resident in VMEM.
    sel = jnp.repeat(jnp.eye(tb, dtype=x.dtype), ts, axis=1)          # (tb, tb*ts)

    x_tile_bytes = tb * ts * nx * itemsize
    sel_bytes = tb * tb * ts * itemsize
    out_blk_bytes = 2 * 2 * (tb * k * 4)
    need = (2 * x_tile_bytes + 2 * sel_bytes + tb * nx * 4
            + 2 * (w_bytes + b_bytes) + out_blk_bytes)
    vmem_limit = int(min((vmem_cap * 9) // 10,
                         max(4 * 1024 * 1024, (need * 5) // 4 + (1 << 20))))

    kernel = functools.partial(_topk_route_kernel, k=k, seq_len=S)
    grid_spec = pltpu.PrefetchScalarGridSpec(
        num_scalar_prefetch=0,
        grid=grid,
        in_specs=[
            # TODO(synk): on v5e, bump x to pipeline_mode=pl.Buffered(3) if a
            # trace shows exposed per-tile DMA jitter.
            pl.BlockSpec((tb, ts, nx), lambda bi, si: (bi, si, 0)),   # x tile
            pl.BlockSpec((tb, tb * ts), lambda bi, si: (0, 0)),       # sel (resident)
            pl.BlockSpec((nx, n_exp), lambda bi, si: (0, 0)),         # W (resident)
            pl.BlockSpec((1, n_exp), lambda bi, si: (0, 0)),          # b (resident)
        ],
        out_specs=(
            pl.BlockSpec((tb, k), lambda bi, si: (bi, 0)),            # vals
            pl.BlockSpec((tb, k), lambda bi, si: (bi, 0)),            # idx
        ),
        scratch_shapes=[pltpu.VMEM((tb, nx), jnp.float32)],
    )
    vals, idx = pl.pallas_call(
        kernel,
        grid_spec=grid_spec,
        out_shape=(
            jax.ShapeDtypeStruct((B_pad, k), jnp.float32),
            jax.ShapeDtypeStruct((B_pad, k), jnp.int32),
        ),
        compiler_params=pltpu.CompilerParams(
            dimension_semantics=("parallel", "arbitrary"),
            vmem_limit_bytes=vmem_limit,
        ),
        cost_estimate=pl.CostEstimate(
            flops=2 * B_pad * S_pad * nx + 2 * B_pad * nx * n_exp,
            transcendentals=B_pad * n_exp,
            bytes_accessed=(B_pad * S_pad * nx * itemsize + w_bytes + b_bytes
                            + 2 * B_pad * k * 4),
        ),
    )(x, sel, w, b2)

    if B_pad != B:
        vals, idx = vals[:B], idx[:B]
    return vals, idx


def _reference(x, w, b, k):
    b2 = jnp.reshape(b, (1, -1)).astype(jnp.float32)
    scores = jnp.einsum("bsn,ne->bse", x.astype(jnp.float32),
                        w.astype(jnp.float32)) + b2[None]
    scores = scores.mean(axis=1)
    probs = jax.nn.softmax(scores, axis=1)
    vals, idx = jax.lax.top_k(probs, k)
    return vals, idx.astype(jnp.int32)


def _check(x, w, b, k, **tile_kwargs):
    vals, idx = topk_route(x, w, b, k, **tile_kwargs)
    jax.block_until_ready((vals, idx))
    ref_vals, ref_idx = _reference(x, w, b, k)
    # Indices are exact (monotone scaling never changes top-k ordering).
    assert jnp.array_equal(idx, ref_idx), (idx, ref_idx)
    # Values are exactly normalized; only f32 summation-order noise remains.
    assert jnp.allclose(vals, ref_vals, rtol=1e-4, atol=1e-5), (vals, ref_vals)


if __name__ == "__main__":
    # Small shapes consistent with the module: batch=2, seq=8, nx=32, n_exp=8, k=2
    B, S, nx, n_exp, k = 2, 8, 32, 8, 2

    key = jax.random.PRNGKey(0)
    kx, kw, kb = jax.random.split(key, 3)

    x = jax.random.normal(kx, (B, S, nx), dtype=jnp.float32)
    # Deterministic Linear init (torch-style uniform +-1/sqrt(nx)); W stored as (nx, n_exp)
    bound = 1.0 / (nx ** 0.5)
    w = jax.random.uniform(kw, (nx, n_exp), jnp.float32, -bound, bound)
    b = jax.random.uniform(kb, (n_exp,), jnp.float32, -bound, bound)

    # 1) default tiling (single block at these toy shapes)
    _check(x, w, b, k)

    # 2) force multiple S tiles to exercise the resident accumulator / epilogue
    x2 = jax.random.normal(jax.random.PRNGKey(1), (B, 64, nx), dtype=jnp.float32)
    _check(x2, w, b, k, seq_tile=8)

    # 3) awkward B/S exercise the zero-padding path (B=10 -> 16, S=13 -> 16)
    x3 = jax.random.normal(jax.random.PRNGKey(2), (10, 13, nx), dtype=jnp.float32)
    _check(x3, w, b, k)

    print("KERNEL_OK")
</pallas_src>

<mosaic_0001>
module attributes {stable_mosaic.version = 11 : i64} {
  func.func @_topk_route_kernel(%arg0: i32, %arg1: i32, %arg2: memref<2x8x32xf32, #tpu.memory_space<vmem>>, %arg3: memref<2x16xf32, #tpu.memory_space<vmem>>, %arg4: memref<32x8xf32, #tpu.memory_space<vmem>>, %arg5: memref<1x8xf32, #tpu.memory_space<vmem>>, %arg6: memref<2x2xf32, #tpu.memory_space<vmem>>, %arg7: memref<2x2xi32, #tpu.memory_space<vmem>>, %arg8: memref<2x32xf32, #tpu.memory_space<vmem>>) attributes {dimension_semantics = [#tpu.dimension_semantics<parallel>, #tpu.dimension_semantics<arbitrary>], iteration_bounds = array<i64: 1, 1>, scalar_prefetch = 0 : i64, scratch_operands = 1 : i64, tpu.core_type = #tpu.core_type<tc>, window_params = [{transform_indices = @transform_0, window_bounds = array<i64: 2, 8, 32>}, {pipeline_mode = #tpu.pipeline_mode<synchronous>, transform_indices = @transform_1, window_bounds = array<i64: 2, 16>}, {pipeline_mode = #tpu.pipeline_mode<synchronous>, transform_indices = @transform_2, window_bounds = array<i64: 32, 8>}, {pipeline_mode = #tpu.pipeline_mode<synchronous>, transform_indices = @transform_3, window_bounds = array<i64: 1, 8>}, {transform_indices = @transform_4, window_bounds = array<i64: 2, 2>}, {transform_indices = @transform_5, window_bounds = array<i64: 2, 2>}]} {
    %c0_i32 = arith.constant 0 : i32
    %0 = arith.cmpi eq, %arg1, %c0_i32 : i32
    %1 = arith.extui %0 : i1 to i32
    %c0_i32_0 = arith.constant 0 : i32
    %2 = arith.cmpi ne, %1, %c0_i32_0 : i32
    scf.if %2 {
      %cst_11 = arith.constant 0.000000e+00 : f32
      %13 = vector.broadcast %cst_11 : f32 to vector<2x32xf32>
      %c0_12 = arith.constant 0 : index
      %c0_13 = arith.constant 0 : index
      %14 = vector.load %arg8[%c0_12, %c0_13] : memref<2x32xf32, #tpu.memory_space<vmem>>, vector<2x32xf32>
      tpu.vector_store %arg8[%c0_12, %c0_13], %13 {strides = array<i32>} : memref<2x32xf32, #tpu.memory_space<vmem>>, vector<2x32xf32>,
    } else {
    }
    %c0 = arith.constant 0 : index
    %c0_1 = arith.constant 0 : index
    %c0_2 = arith.constant 0 : index
    %3 = vector.load %arg2[%c0, %c0_1, %c0_2] : memref<2x8x32xf32, #tpu.memory_space<vmem>>, vector<2x8x32xf32>
    %4 = vector.shape_cast %3 : vector<2x8x32xf32> to vector<16x32xf32>
    %c0_3 = arith.constant 0 : index
    %c0_4 = arith.constant 0 : index
    %5 = vector.load %arg8[%c0_3, %c0_4] : memref<2x32xf32, #tpu.memory_space<vmem>>, vector<2x32xf32>
    %c0_5 = arith.constant 0 : index
    %c0_6 = arith.constant 0 : index
    %6 = vector.load %arg3[%c0_5, %c0_6] : memref<2x16xf32, #tpu.memory_space<vmem>>, vector<2x16xf32>
    %cst = arith.constant dense<0.000000e+00> : vector<2x32xf32>
    %7 = tpu.matmul %6, %4, %cst {dimension_numbers = #tpu.dot_dimension_numbers<[1], [0], [0], [1], [0, 0, 1, 1], [], []>} : vector<2x16xf32>, vector<16x32xf32>, vector<2x32xf32> -> vector<2x32xf32>
    %8 = arith.addf %5, %7 : vector<2x32xf32>
    %c0_7 = arith.constant 0 : index
    %c0_8 = arith.constant 0 : index
    %9 = vector.load %arg8[%c0_7, %c0_8] : memref<2x32xf32, #tpu.memory_space<vmem>>, vector<2x32xf32>
    tpu.vector_store %arg8[%c0_7, %c0_8], %8 {strides = array<i32>} : memref<2x32xf32, #tpu.memory_space<vmem>>, vector<2x32xf32>,
    %c0_i32_9 = arith.constant 0 : i32
    %10 = arith.cmpi eq, %arg1, %c0_i32_9 : i32
    %11 = arith.extui %10 : i1 to i32
    %c0_i32_10 = arith.constant 0 : i32
    %12 = arith.cmpi ne, %11, %c0_i32_10 : i32
    scf.if %12 {
      %c0_11 = arith.constant 0 : index
      %c0_12 = arith.constant 0 : index
      %13 = vector.load %arg8[%c0_11, %c0_12] : memref<2x32xf32, #tpu.memory_space<vmem>>, vector<2x32xf32>
      %cst_13 = arith.constant 1.250000e-01 : f32
      %14 = vector.broadcast %cst_13 : f32 to vector<2x32xf32>
      %15 = arith.mulf %13, %14 : vector<2x32xf32>
      %c0_14 = arith.constant 0 : index
      %c0_15 = arith.constant 0 : index
      %16 = vector.load %arg4[%c0_14, %c0_15] : memref<32x8xf32, #tpu.memory_space<vmem>>, vector<32x8xf32>
      %c0_16 = arith.constant 0 : index
      %c0_17 = arith.constant 0 : index
      %17 = vector.load %arg5[%c0_16, %c0_17] : memref<1x8xf32, #tpu.memory_space<vmem>>, vector<1x8xf32>
      %cst_18 = arith.constant dense<0.000000e+00> : vector<2x8xf32>
      %18 = tpu.matmul %15, %16, %cst_18 {dimension_numbers = #tpu.dot_dimension_numbers<[1], [0], [0], [1], [0, 0, 1, 1], [], []>} : vector<2x32xf32>, vector<32x8xf32>, vector<2x8xf32> -> vector<2x8xf32>
      %19 = vector.broadcast %17 : vector<1x8xf32> to vector<2x8xf32>
      %20 = arith.addf %18, %19 : vector<2x8xf32>
      %cst_19 = arith.constant dense<0xFF800000> : vector<2xf32>
      %21 = vector.multi_reduction <maximumf>, %20, %cst_19 [1] : vector<2x8xf32> to vector<2xf32>
      %22 = vector.shape_cast %21 : vector<2xf32> to vector<2x1xf32>
      %23 = vector.broadcast %22 : vector<2x1xf32> to vector<2x8xf32>
      %24 = arith.subf %20, %23 : vector<2x8xf32>
      %25 = math.exp %24 : vector<2x8xf32>
      %cst_20 = arith.constant dense<0.000000e+00> : vector<2xf32>
      %26 = vector.multi_reduction <add>, %25, %cst_20 [1] : vector<2x8xf32> to vector<2xf32>
      %27 = vector.shape_cast %26 : vector<2xf32> to vector<2x1xf32>
      %28 = tpu.iota {dimensions = array<i32: 1>} : vector<2x8xi32>
      %cst_21 = arith.constant dense<0xFF800000> : vector<2xf32>
      %29 = vector.multi_reduction <maximumf>, %25, %cst_21 [1] : vector<2x8xf32> to vector<2xf32>
      %30 = vector.shape_cast %29 : vector<2xf32> to vector<2x1xf32>
      %31 = vector.broadcast %30 : vector<2x1xf32> to vector<2x8xf32>
      %32 = arith.cmpf oeq, %25, %31 : vector<2x8xf32>
      %c8_i32 = arith.constant 8 : i32
      %33 = vector.broadcast %c8_i32 : i32 to vector<2x8xi32>
      %34 = arith.select %32, %28, %33 : vector<2x8xi1>, vector<2x8xi32>
      %cst_22 = arith.constant dense<2147483647> : vector<2xi32>
      %35 = vector.multi_reduction <minsi>, %34, %cst_22 [1] : vector<2x8xi32> to vector<2xi32>
      %36 = vector.shape_cast %35 : vector<2xi32> to vector<2x1xi32>
      %37 = vector.broadcast %36 : vector<2x1xi32> to vector<2x8xi32>
      %38 = arith.cmpi eq, %28, %37 : vector<2x8xi32>
      %cst_23 = arith.constant 0xFF800000 : f32
      %39 = vector.broadcast %cst_23 : f32 to vector<2x8xf32>
      %40 = arith.select %38, %39, %25 : vector<2x8xi1>, vector<2x8xf32>
      %cst_24 = arith.constant dense<0xFF800000> : vector<2xf32>
      %41 = vector.multi_reduction <maximumf>, %40, %cst_24 [1] : vector<2x8xf32> to vector<2xf32>
      %42 = vector.shape_cast %41 : vector<2xf32> to vector<2x1xf32>
      %43 = vector.broadcast %42 : vector<2x1xf32> to vector<2x8xf32>
      %44 = arith.cmpf oeq, %40, %43 : vector<2x8xf32>
      %c8_i32_25 = arith.constant 8 : i32
      %45 = vector.broadcast %c8_i32_25 : i32 to vector<2x8xi32>
      %46 = arith.select %44, %28, %45 : vector<2x8xi1>, vector<2x8xi32>
      %cst_26 = arith.constant dense<2147483647> : vector<2xi32>
      %47 = vector.multi_reduction <minsi>, %46, %cst_26 [1] : vector<2x8xi32> to vector<2xi32>
      %48 = vector.shape_cast %47 : vector<2xi32> to vector<2x1xi32>
      %49 = tpu.concatenate %30, %42 in 1 : vector<2x1xf32>, vector<2x1xf32> -> vector<2x2xf32>
      %50 = vector.broadcast %27 : vector<2x1xf32> to vector<2x2xf32>
      %51 = arith.divf %49, %50 : vector<2x2xf32>
      %c0_27 = arith.constant 0 : index
      %c0_28 = arith.constant 0 : index
      %52 = vector.load %arg6[%c0_27, %c0_28] : memref<2x2xf32, #tpu.memory_space<vmem>>, vector<2x2xf32>
      tpu.vector_store %arg6[%c0_27, %c0_28], %51 {strides = array<i32>} : memref<2x2xf32, #tpu.memory_space<vmem>>, vector<2x2xf32>,
      %53 = tpu.concatenate %36, %48 in 1 : vector<2x1xi32>, vector<2x1xi32> -> vector<2x2xi32>
      %c0_29 = arith.constant 0 : index
      %c0_30 = arith.constant 0 : index
      %54 = vector.load %arg7[%c0_29, %c0_30] : memref<2x2xi32, #tpu.memory_space<vmem>>, vector<2x2xi32>
      tpu.vector_store %arg7[%c0_29, %c0_30], %53 {strides = array<i32>} : memref<2x2xi32, #tpu.memory_space<vmem>>, vector<2x2xi32>,
    } else {
    }
    return
  }
  func.func @transform_0(%arg0: i32, %arg1: i32) -> (i32, i32, i32) {
    %c0_i32 = arith.constant 0 : i32
    %c0_i32_0 = arith.constant 0 : i32
    return %arg0, %arg1, %c0_i32 : i32, i32, i32
  }
  func.func @transform_1(%arg0: i32, %arg1: i32) -> (i32, i32) {
    %c0_i32 = arith.constant 0 : i32
    %c0_i32_0 = arith.constant 0 : i32
    %c0_i32_1 = arith.constant 0 : i32
    return %c0_i32, %c0_i32_0 : i32, i32
  }
  func.func @transform_2(%arg0: i32, %arg1: i32) -> (i32, i32) {
    %c0_i32 = arith.constant 0 : i32
    %c0_i32_0 = arith.constant 0 : i32
    %c0_i32_1 = arith.constant 0 : i32
    return %c0_i32, %c0_i32_0 : i32, i32
  }
  func.func @transform_3(%arg0: i32, %arg1: i32) -> (i32, i32) {
    %c0_i32 = arith.constant 0 : i32
    %c0_i32_0 = arith.constant 0 : i32
    %c0_i32_1 = arith.constant 0 : i32
    return %c0_i32, %c0_i32_0 : i32, i32
  }
  func.func @transform_4(%arg0: i32, %arg1: i32) -> (i32, i32) {
    %c0_i32 = arith.constant 0 : i32
    %c0_i32_0 = arith.constant 0 : i32
    return %arg0, %c0_i32 : i32, i32
  }
  func.func @transform_5(%arg0: i32, %arg1: i32) -> (i32, i32) {
    %c0_i32 = arith.constant 0 : i32
    %c0_i32_0 = arith.constant 0 : i32
    return %arg0, %c0_i32 : i32, i32
  }
}

</mosaic_0001>

<llo_original>
// kernel: tpu_custom_call.1
$region0: #{tpu_custom_call.1}
  #allocation0 [shape = 'u32[]', space=smem, size = 0x4, offset = 0x4, fixed_abs, tag = 'smem constant byte address 0x4 - core index']
  #allocation1 [shape = 'u32[144,128]{1,0:T(1,128)}', space=vmem, size = 0x12000, scoped, tag = 'internal scratch']
  #allocation2 [shape = 'f32[2,32]{1,0:T(2,128)}', space=vmem, size = 0x400, scoped, tag = 'scratch operand']
  %s0 = inlined_call_operand.vmem [shape: f32[2,8,32], index: 0, kind: input, shape index: {}]
  %s1 = inlined_call_operand.vmem [shape: f32[2,16], index: 1, kind: input, shape index: {}]
  %s2 = inlined_call_operand.vmem [shape: f32[32,8], index: 2, kind: input, shape index: {}]
  %s3 = inlined_call_operand.vmem [shape: f32[1,8], index: 3, kind: input, shape index: {}]
  %s4 = inlined_call_operand.hbm [shape: f32[2,2], index: 4, kind: output, shape index: {0}]
  %s5 = inlined_call_operand.hbm [shape: s32[2,2], index: 5, kind: output, shape index: {1}]
  %6 = xla_tuple %s4, %s5
  %s7 = sld [smem:[#allocation0]]
  $region42: #{tpu_custom_call.1} parent=0
    _
  %s9 = ssub.s32 1, %s7
  %s10 = scalar_select 0, %s9, %s7
  $region1: #{tpu_custom_call.1} parent=0
    #allocation3 [shape = 'u8[1024]{0}', space=vmem, size = 0x400, scoped, tag = 'output window, operand 0, single buffered']
    #allocation4 [shape = 's32[1]{0}', space=sflag, size = 0x4, scoped, tag = 'scoped memory for tpu_custom_call.1']
    #allocation5 [shape = 'u8[1024]{0}', space=vmem, size = 0x400, scoped, tag = 'output window, operand 1, single buffered']
    #allocation6 [shape = 's32[1]{0}', space=sflag, size = 0x4, scoped, tag = 'scoped memory for tpu_custom_call.1']
    %11 = vsyncpa [#allocation4], 0
    %12 = vsyncpa [#allocation6], 0
    // Predicated region
    $region2: #{tpu_custom_call.1} parent=1 // pred_check
      _
    $region3: #{tpu_custom_call.1} parent=1 // pred_check_branch
      %14 = sbr.rel (0) target = $region5
    $region4: #{tpu_custom_call.1} parent=1 // pred_region
      _
    $region5: #{tpu_custom_call.1} parent=1 // pred_fallthru
      _
    // Predicated region
    $region6: #{tpu_custom_call.1} parent=1 // pred_check
      _
    $region7: #{tpu_custom_call.1} parent=1 // pred_check_branch
      %16 = sbr.rel (0) target = $region9
    $region8: #{tpu_custom_call.1} parent=1 // pred_region
      _
    $region9: #{tpu_custom_call.1} parent=1 // pred_fallthru
      _
    // Predicated region
    $region10: #{tpu_custom_call.1} parent=1 // pred_check
      _
    $region11: #{tpu_custom_call.1} parent=1 // pred_check_branch
      %18 = sbr.rel (0) target = $region13
    $region12: #{tpu_custom_call.1} parent=1 // pred_region
      _
    $region13: #{tpu_custom_call.1} parent=1 // pred_fallthru
      _
    // Predicated region
    $region14: #{tpu_custom_call.1} parent=1 // pred_check
      _
    $region15: #{tpu_custom_call.1} parent=1 // pred_check_branch
      %20 = sbr.rel (0) target = $region17
    $region16: #{tpu_custom_call.1} parent=1 // pred_region
      _
    $region17: #{tpu_custom_call.1} parent=1 // pred_fallthru
      _
    %p21 = scmp.eq.s32.totalorder 0, 0
    // Predicated region
    $region18: #{tpu_custom_call.1} parent=1 // pred_check
      %p22 = pneg %p21
    $region19: #{tpu_custom_call.1} parent=1 // pred_check_branch
      %24 = sbr.rel (%p22) target = $region21
    $region20: #{tpu_custom_call.1} parent=1 // pred_region
      %vm25 = vcmask 254976
      %26 = vst.msk [vmem:[#allocation2] sm:$0x3] %vm25, 0.0
    $region21: #{tpu_custom_call.1} parent=1 // pred_fallthru
      _
    %v27 = vld [vmem:[%s0] sm:$0xff]
    %v28 = vld [vmem:[%s0 + $0x8] sm:$0xff]
    %v29 = vld [vmem:[#allocation2] sm:$0x3]
    %v30 = vld [vmem:[%s1] sm:$0x3]
    %vm31 = vcmask 130048
    %v33 = vsel %vm31, %v30, 0
    %35 = vmatprep.subr.mxu0 0.0
    %36 = vmatpush1.msra.mxu0 %v27
    %37 = vmatprep.subr.mxu0 0.0
    %38 = vmatpush1.msra.mxu0 %v28
    %39 = vmatprep.subr.mxu0 0.0
    %40 = vmatpush1.msra.mxu0 0.0
    %41 = vmatprep.subr.mxu0 0.0
    %42 = vmatpush1.msra.mxu0 0.0
    %43 = vmatprep.subr.mxu0 0.0
    %44 = vmatpush1.msra.mxu0 0.0
    %45 = vmatprep.subr.mxu0 0.0
    %46 = vmatpush1.msra.mxu0 0.0
    %47 = vmatprep.subr.mxu0 0.0
    %48 = vmatpush1.msra.mxu0 0.0
    %49 = vmatprep.subr.mxu0 0.0
    %50 = vmatpush1.msra.mxu0 0.0
    %51 = vmatprep.subr.mxu0 0.0
    %52 = vmatpush1.msra.mxu0 0.0
    %53 = vmatprep.subr.mxu0 0.0
    %54 = vmatpush1.msra.mxu0 0.0
    %55 = vmatprep.subr.mxu0 0.0
    %56 = vmatpush1.msra.mxu0 0.0
    %57 = vmatprep.subr.mxu0 0.0
    %58 = vmatpush1.msra.mxu0 0.0
    %59 = vmatprep.subr.mxu0 0.0
    %60 = vmatpush1.msra.mxu0 0.0
    %61 = vmatprep.subr.mxu0 0.0
    %62 = vmatpush1.msra.mxu0 0.0
    %63 = vmatprep.subr.mxu0 0.0
    %64 = vmatpush1.msra.mxu0 0.0
    %65 = vmatprep.subr.mxu0 0.0
    %66 = vmatpush1.msra.mxu0 0.0
    %67 = vmatprep.subr.mxu0 0.0
    %68 = vmatpush1.msra.mxu0 0.0
    %69 = vmatprep.subr.mxu0 0.0
    %70 = vmatpush1.msra.mxu0 0.0
    %71 = vmatprep.subr.mxu0 0.0
    %72 = vmatpush1.msra.mxu0 0.0
    %73 = vmatprep.subr.mxu0 0.0
    %74 = vmatpush1.msra.mxu0 0.0
    %75 = vmatprep.subr.mxu0 0.0
    %76 = vmatpush1.msra.mxu0 0.0
    %77 = vmatprep.subr.mxu0 0.0
    %78 = vmatpush1.msra.mxu0 0.0
    %79 = vmatprep.subr.mxu0 0.0
    %80 = vmatpush1.msra.mxu0 0.0
    %81 = vmatprep.subr.mxu0 0.0
    %82 = vmatpush1.msra.mxu0 0.0
    %83 = vmatprep.subr.mxu0 0.0
    %84 = vmatpush1.msra.mxu0 0.0
    %85 = vmatprep.subr.mxu0 0.0
    %86 = vmatpush1.msra.mxu0 0.0
    %87 = vmatprep.subr.mxu0 0.0
    %88 = vmatpush1.msra.mxu0 0.0
    %89 = vmatprep.subr.mxu0 0.0
    %90 = vmatpush1.msra.mxu0 0.0
    %91 = vmatprep.subr.mxu0 0.0
    %92 = vmatpush1.msra.mxu0 0.0
    %93 = vmatprep.subr.mxu0 0.0
    %94 = vmatpush1.msra.mxu0 0.0
    %95 = vmatprep.subr.mxu0 0.0
    %96 = vmatpush1.msra.mxu0 0.0
    %97 = vmatprep.subr.mxu0 0.0
    %98 = vmatpush1.msra.mxu0 0.0
    %99 = vmatprep.mubr.f32.mxu0 0.0
    %100 = vmatmul.mubr.f32.gmra.mrb[0].mxu0 %v33
    %v101 = vpop.f32.mrb[0].mxu0
    %v102 = vadd.f32 0.0, %v101
    %v103 = vpop.f32.mrb[0].mxu0
    %104 = vdwg.mxu0
    %v105 = vadd.f32 %v29, %v102
    %vm106 = vcmask 254976
    %107 = vst.msk [vmem:[#allocation2] sm:$0x3] %vm106, %v105
    // Predicated region
    $region22: #{tpu_custom_call.1} parent=1 // pred_check
      %p108 = pneg %p21
    $region23: #{tpu_custom_call.1} parent=1 // pred_check_branch
      %110 = sbr.rel (%p108) target = $region25
    $region24: #{tpu_custom_call.1} parent=1 // pred_region
      %v111 = vld [vmem:[#allocation2] sm:$0x3]
      %v112 = vmul.f32 %v111, 0.125
      %v113 = vld [vmem:[%s2] sm:$0xff]
      %v114 = vld [vmem:[%s2 + $0x8] sm:$0xff]
      %v115 = vld [vmem:[%s2 + $0x10] sm:$0xff]
      %v116 = vld [vmem:[%s2 + $0x18] sm:$0xff]
      %v117 = vld [vmem:[%s3] sm:$0x1]
      %v119 = vlaneseq
      %v120 = vshrl.u32 %v119, 7
      %v121 = vsub.s32 0, %v120
      %v122 = vrot.slane %v117, %v121
      %vm124 = vcmask 261120
      %v126 = vsel %vm124, %v112, 0
      %128 = vmatprep.subr.mxu0 0.0
      %129 = vmatpush1.msra.mxu0 %v113
      %130 = vmatprep.subr.mxu0 0.0
      %131 = vmatpush1.msra.mxu0 %v114
      %132 = vmatprep.subr.mxu0 0.0
      %133 = vmatpush1.msra.mxu0 %v115
      %134 = vmatprep.subr.mxu0 0.0
      %135 = vmatpush1.msra.mxu0 %v116
      %136 = vmatprep.subr.mxu0 0.0
      %137 = vmatpush1.msra.mxu0 0.0
      %138 = vmatprep.subr.mxu0 0.0
      %139 = vmatpush1.msra.mxu0 0.0
      %140 = vmatprep.subr.mxu0 0.0
      %141 = vmatpush1.msra.mxu0 0.0
      %142 = vmatprep.subr.mxu0 0.0
      %143 = vmatpush1.msra.mxu0 0.0
      %144 = vmatprep.subr.mxu0 0.0
      %145 = vmatpush1.msra.mxu0 0.0
      %146 = vmatprep.subr.mxu0 0.0
      %147 = vmatpush1.msra.mxu0 0.0
      %148 = vmatprep.subr.mxu0 0.0
      %149 = vmatpush1.msra.mxu0 0.0
      %150 = vmatprep.subr.mxu0 0.0
      %151 = vmatpush1.msra.mxu0 0.0
      %152 = vmatprep.subr.mxu0 0.0
      %153 = vmatpush1.msra.mxu0 0.0
      %154 = vmatprep.subr.mxu0 0.0
      %155 = vmatpush1.msra.mxu0 0.0
      %156 = vmatprep.subr.mxu0 0.0
      %157 = vmatpush1.msra.mxu0 0.0
      %158 = vmatprep.subr.mxu0 0.0
      %159 = vmatpush1.msra.mxu0 0.0
      %160 = vmatprep.subr.mxu0 0.0
      %161 = vmatpush1.msra.mxu0 0.0
      %162 = vmatprep.subr.mxu0 0.0
      %163 = vmatpush1.msra.mxu0 0.0
      %164 = vmatprep.subr.mxu0 0.0
      %165 = vmatpush1.msra.mxu0 0.0
      %166 = vmatprep.subr.mxu0 0.0
      %167 = vmatpush1.msra.mxu0 0.0
      %168 = vmatprep.subr.mxu0 0.0
      %169 = vmatpush1.msra.mxu0 0.0
      %170 = vmatprep.subr.mxu0 0.0
      %171 = vmatpush1.msra.mxu0 0.0
      %172 = vmatprep.subr.mxu0 0.0
      %173 = vmatpush1.msra.mxu0 0.0
      %174 = vmatprep.subr.mxu0 0.0
      %175 = vmatpush1.msra.mxu0 0.0
      %176 = vmatprep.subr.mxu0 0.0
      %177 = vmatpush1.msra.mxu0 0.0
      %178 = vmatprep.subr.mxu0 0.0
      %179 = vmatpush1.msra.mxu0 0.0
      %180 = vmatprep.subr.mxu0 0.0
      %181 = vmatpush1.msra.mxu0 0.0
      %182 = vmatprep.subr.mxu0 0.0
      %183 = vmatpush1.msra.mxu0 0.0
      %184 = vmatprep.subr.mxu0 0.0
      %185 = vmatpush1.msra.mxu0 0.0
      %186 = vmatprep.subr.mxu0 0.0
      %187 = vmatpush1.msra.mxu0 0.0
      %188 = vmatprep.subr.mxu0 0.0
      %189 = vmatpush1.msra.mxu0 0.0
      %190 = vmatprep.subr.mxu0 0.0
      %191 = vmatpush1.msra.mxu0 0.0
      %192 = vmatprep.mubr.f32.mxu0 0.0
      %193 = vmatmul.mubr.f32.gmra.mrb[0].mxu0 %v126
      %v194 = vpop.f32.mrb[0].mxu0
      %v195 = vadd.f32 %v122, %v194
      %v196 = vpop.f32.mrb[0].mxu0
      %197 = vdwg.mxu0
      %vm198 = vcmask 58368
      %v199 = vsel %vm198, %v195, -inf
      %200 = vmax.xlane.f32.xlu0 %v199
      %v201 = vpop.xlane.xlu0 %200
      %v202 = vsub.f32 %v195, %v201
      %v203 = vmul.f32 %v202, 1.442695
      %v204 = vpow.pop %v203
      %v205 = vsel %vm198, %v204, 0.0
      %206 = vadd.xlane.f32.xlu0 %v205
      %v207 = vpop.xlane.xlu0 %206
      %v208 = vlaneseq
      %v209 = vand.u32 %v208, 127
      %v210 = vsel %vm198, %v204, -inf
      %211 = vmax.xlane.f32.xlu0 %v210
      %v212 = vpop.xlane.xlu0 %211
      %vm213 = vcmp.eq.f32.partialorder %v204, %v212
      %v214 = vsel %vm213, %v209, 8
      %v215 = vsel %vm198, %v214, 2147483647
      %v216 = vand.u32 %v215, 65535
      %v217 = vshra.s32 %v215, 16
      %v218 = vcvt.s32.f32 %v216
      %v219 = vcvt.s32.f32 %v217
      %220 = vmin.xlane.f32.xlu0 %v219
      %v221 = vpop.xlane.xlu0 %220
      %vm222 = vcmp.eq.f32.partialorder %v219, %v221
      %v223 = vsel %vm222, %v218, inf
      %224 = vmin.xlane.f32.xlu0 %v223
      %v225 = vpop.xlane.xlu0 %224
      %v226 = vcvt.f32.s32 %v225
      %v227 = vcvt.f32.s32 %v221
      %v228 = vshll.u32 %v227, 16
      %v229 = vadd.s32 %v228, %v226
      %vm230 = vcmp.eq.s32.totalorder %v209, %v229
      %v231 = vsel %vm230, -inf, %v204
      %v232 = vsel %vm198, %v231, -inf
      %233 = vmax.xlane.f32.xlu0 %v232
      %v234 = vpop.xlane.xlu0 %233
      %vm235 = vcmp.eq.f32.partialorder %v231, %v234
      %v236 = vsel %vm235, %v209, 8
      %v237 = vsel %vm198, %v236, 2147483647
      %v238 = vand.u32 %v237, 65535
      %v239 = vshra.s32 %v237, 16
      %v240 = vcvt.s32.f32 %v238
      %v241 = vcvt.s32.f32 %v239
      %242 = vmin.xlane.f32.xlu0 %v241
      %v243 = vpop.xlane.xlu0 %242
      %vm244 = vcmp.eq.f32.partialorder %v241, %v243
      %v245 = vsel %vm244, %v240, inf
      %246 = vmin.xlane.f32.xlu0 %v245
      %v247 = vpop.xlane.xlu0 %246
      %v248 = vcvt.f32.s32 %v247
      %v249 = vcvt.f32.s32 %v243
      %v250 = vshll.u32 %v249, 16
      %v251 = vadd.s32 %v250, %v248
      %vm252 = vcmask 7168
      %v253 = vsel %vm252, %v212, %v234
      %v254 = vrcp.pop %v207
      %v255 = vmul.f32 %v253, %v254
      %vm256 = vcmask 9216
      %257 = vst.msk [vmem:[#allocation3] sm:$0x3] %vm256, %v255
      %v258 = vsel %vm252, %v229, %v251
      %259 = vst.msk [vmem:[#allocation5] sm:$0x3] %vm256, %v258
    $region25: #{tpu_custom_call.1} parent=1 // pred_fallthru
      _
    // Predicated region
    $region26: #{tpu_custom_call.1} parent=1 // pred_check
      _
    $region27: #{tpu_custom_call.1} parent=1 // pred_check_branch
      %261 = sbr.rel (0) target = $region29
    $region28: #{tpu_custom_call.1} parent=1 // pred_region
      %s263 = ssub.s32 32, 32
      %264 = vsyncadd [#allocation4], %s263
      %s266 = sshll.u32 [#allocation3], 4
      %s267 = int_to_ptr.vmem [resolvable:$true] %s266
      %269 = dma.vmem_to_hbm [thread:$0]  %s267, 32, %s4, [#allocation4]
    $region29: #{tpu_custom_call.1} parent=1 // pred_fallthru
      _
    // Predicated region
    $region30: #{tpu_custom_call.1} parent=1 // pred_check
      _
    $region31: #{tpu_custom_call.1} parent=1 // pred_check_branch
      %271 = sbr.rel (0) target = $region33
    $region32: #{tpu_custom_call.1} parent=1 // pred_region
      %s273 = ssub.s32 32, 32
      %274 = vsyncadd [#allocation6], %s273
      %s276 = sshll.u32 [#allocation5], 4
      %s277 = int_to_ptr.vmem [resolvable:$true] %s276
      %279 = dma.vmem_to_hbm [thread:$0]  %s277, 32, %s5, [#allocation6]
    $region33: #{tpu_custom_call.1} parent=1 // pred_fallthru
      _
    // Predicated region
    $region34: #{tpu_custom_call.1} parent=1 // pred_check
      _
    $region35: #{tpu_custom_call.1} parent=1 // pred_check_branch
      %281 = sbr.rel (0) target = $region37
    $region36: #{tpu_custom_call.1} parent=1 // pred_region
      %282 = dma.done [#allocation4], 32
    $region37: #{tpu_custom_call.1} parent=1 // pred_fallthru
      _
    // Predicated region
    $region38: #{tpu_custom_call.1} parent=1 // pred_check
      _
    $region39: #{tpu_custom_call.1} parent=1 // pred_check_branch
      %284 = sbr.rel (0) target = $region41
    $region40: #{tpu_custom_call.1} parent=1 // pred_region
      %285 = dma.done [#allocation6], 32
    $region41: #{tpu_custom_call.1} parent=1 // pred_fallthru
      _
    %286 = vsyncpa [#allocation4], 1
    %287 = vsyncpa [#allocation6], 1

</llo_original>
